<compile_context>
chip_gen: v7x
topology: tpu7x:2x2x1
jax: 0.10.0
libtpu: 0.0.40
codegen_flags: <defaults>
</compile_context>

<pallas_src>
import functools

import numpy as np
import jax
import jax.numpy as jnp
from jax.experimental import pallas as pl
from jax.experimental.pallas import tpu as pltpu

STATE_ENCODED_DIM = 128
IN_FEATURES = 3
PADDED_K = 8          # K=3 zero-padded to the sublane width so layer 1 uses the MXU
NEG_SLOPE = 0.01      # PyTorch nn.LeakyReLU default negative_slope


def _mlp_kernel(x_ref, w1_ref, b1_ref, w2_ref, b2_ref, o_ref):
    # x_ref : (TM, 8)   f32, columns 3..7 are explicit zeros (padded in wrapper)
    # w1_ref: (8, 128)  f32, rows 3..7 are explicit zeros
    # b1_ref: (1, 128)  f32
    # w2_ref: (128,128) bf16 (cast once in wrapper)
    # b2_ref: (1, 128)  f32
    # o_ref : (TM, 128) bf16 (or f32 if requested)

    # Layer 1 on the MXU (padded K=8; pad rows/cols are zeroed host-side).
    h = jnp.dot(x_ref[...], w1_ref[...],
                preferred_element_type=jnp.float32) + b1_ref[...]

    # LeakyReLU(0.01): max(h, 0.01*h) is bit-identical for slope < 1.
    h = jnp.maximum(h, NEG_SLOPE * h)

    # Layer 2 on the MXU: bf16 operands, f32 accumulation.
    out = jnp.dot(h.astype(jnp.bfloat16), w2_ref[...],
                  preferred_element_type=jnp.float32) + b2_ref[...]
    o_ref[...] = out.astype(o_ref.dtype)


def _round_up(v, mult):
    return ((v + mult - 1) // mult) * mult


@functools.partial(jax.jit, static_argnames=("tm", "out_dtype"))
def net_state_encoder(x, w1, b1, w2, b2, *, tm=4096, out_dtype=jnp.bfloat16):
    """x: (..., 3) float32 -> (..., 128) out_dtype (bf16 by default)."""
    lead_shape = x.shape[:-1]
    m = 1
    for d in lead_shape:
        m *= d
    x2d = x.reshape(m, IN_FEATURES)

    # Hoisted prep: zero-pad K 3 -> 8 (MXU layer 1 must never see undefined
    # lane padding), cast w2 to bf16 once.
    x_pad = jnp.pad(x2d, ((0, 0), (0, PADDED_K - IN_FEATURES)))
    w1_pad = jnp.pad(w1, ((0, PADDED_K - IN_FEATURES), (0, 0)))
    w2_bf16 = w2.astype(jnp.bfloat16)

    # Row tile: multiple of 8 (sublane). Ensure >= 2 grid steps when m > 8 so
    # both v7x TensorCores receive work; rows are independent, so the masked
    # partial last block is safe (no cross-row ops).
    if m > 8:
        tm_eff = min(tm, _round_up(-(-m // 2), 8))
    else:
        tm_eff = min(tm, _round_up(max(m, 1), 8))

    grid = (pl.cdiv(m, tm_eff),)

    out_bytes = np.dtype(out_dtype).itemsize
    cost = pl.CostEstimate(
        flops=2 * m * STATE_ENCODED_DIM * (PADDED_K + STATE_ENCODED_DIM),
        transcendentals=0,
        bytes_accessed=(m * PADDED_K * 4                                   # x read
                        + m * STATE_ENCODED_DIM * out_bytes                # out write
                        + PADDED_K * STATE_ENCODED_DIM * 4                 # w1
                        + STATE_ENCODED_DIM * STATE_ENCODED_DIM * 2        # w2 (bf16)
                        + 2 * STATE_ENCODED_DIM * 4),                      # biases
    )

    out = pl.pallas_call(
        _mlp_kernel,
        out_shape=jax.ShapeDtypeStruct((m, STATE_ENCODED_DIM), out_dtype),
        grid_spec=pltpu.PrefetchScalarGridSpec(
            num_scalar_prefetch=0,
            grid=grid,
            in_specs=[
                pl.BlockSpec((tm_eff, PADDED_K), lambda i: (i, 0)),
                pl.BlockSpec((PADDED_K, STATE_ENCODED_DIM), lambda i: (0, 0)),
                pl.BlockSpec((1, STATE_ENCODED_DIM), lambda i: (0, 0)),
                pl.BlockSpec((STATE_ENCODED_DIM, STATE_ENCODED_DIM), lambda i: (0, 0)),
                pl.BlockSpec((1, STATE_ENCODED_DIM), lambda i: (0, 0)),
            ],
            out_specs=pl.BlockSpec((tm_eff, STATE_ENCODED_DIM), lambda i: (i, 0)),
        ),
        compiler_params=pltpu.CompilerParams(
            dimension_semantics=("parallel",),
            vmem_limit_bytes=32 * 1024 * 1024,
        ),
        cost_estimate=cost,
    )(x_pad, w1_pad, b1, w2_bf16, b2)

    return out.reshape(*lead_shape, STATE_ENCODED_DIM)


def init_params(key):
    """Deterministic param init mirroring nn.Linear shapes.

    PyTorch stores Linear weight as (out, in); we keep (in, out) since the
    kernel multiplies x @ W. Uniform(-1/sqrt(fan_in), 1/sqrt(fan_in)) like
    torch's default init.
    """
    k1, k2, k3, k4 = jax.random.split(key, 4)
    lim1 = 1.0 / jnp.sqrt(jnp.float32(IN_FEATURES))
    lim2 = 1.0 / jnp.sqrt(jnp.float32(STATE_ENCODED_DIM))
    w1 = jax.random.uniform(k1, (IN_FEATURES, STATE_ENCODED_DIM),
                            jnp.float32, -lim1, lim1)
    b1 = jax.random.uniform(k2, (1, STATE_ENCODED_DIM), jnp.float32, -lim1, lim1)
    w2 = jax.random.uniform(k3, (STATE_ENCODED_DIM, STATE_ENCODED_DIM),
                            jnp.float32, -lim2, lim2)
    b2 = jax.random.uniform(k4, (1, STATE_ENCODED_DIM), jnp.float32, -lim2, lim2)
    return w1, b1, w2, b2


def _reference(x, w1, b1, w2, b2):
    h = x @ w1 + b1
    h = jnp.where(h > 0, h, NEG_SLOPE * h)
    return h @ w2 + b2


if __name__ == "__main__":
    key = jax.random.PRNGKey(0)
    kp, kx = jax.random.split(key)
    w1, b1, w2, b2 = init_params(kp)

    # input_states: (batch=2, seq=8, features=3)
    x = jax.random.normal(kx, (2, 8, 3), jnp.float32)

    out = jax.block_until_ready(net_state_encoder(x, w1, b1, w2, b2))
    assert out.shape == (2, 8, STATE_ENCODED_DIM), out.shape

    ref = _reference(x.reshape(-1, 3), w1, b1, w2, b2).reshape(2, 8, STATE_ENCODED_DIM)
    # bf16 MXU operands + bf16 output -> relaxed tolerance vs the f32 reference.
    assert jnp.allclose(out.astype(jnp.float32), ref, atol=3e-2, rtol=3e-2), \
        "mismatch vs reference"

    # Non-multiple-of-tile, larger row count: 2 grid steps, masked last block.
    x_big = jax.random.normal(kx, (3, 1111, 3), jnp.float32)
    out_big = jax.block_until_ready(net_state_encoder(x_big, w1, b1, w2, b2))
    ref_big = _reference(x_big.reshape(-1, 3), w1, b1, w2, b2).reshape(
        3, 1111, STATE_ENCODED_DIM)
    assert jnp.allclose(out_big.astype(jnp.float32), ref_big,
                        atol=3e-2, rtol=3e-2), "mismatch (big)"

    print("KERNEL_OK")
</pallas_src>

<mosaic_0001>
module attributes {stable_mosaic.version = 11 : i64} {
  func.func @_mlp_kernel(%arg0: i32, %arg1: memref<8x8xf32, #tpu.memory_space<vmem>>, %arg2: memref<8x128xf32, #tpu.memory_space<vmem>>, %arg3: memref<1x128xf32, #tpu.memory_space<vmem>>, %arg4: memref<128x128xbf16, #tpu.memory_space<vmem>>, %arg5: memref<1x128xf32, #tpu.memory_space<vmem>>, %arg6: memref<8x128xbf16, #tpu.memory_space<vmem>>) attributes {dimension_semantics = [#tpu.dimension_semantics<parallel>], iteration_bounds = array<i64: 2>, scalar_prefetch = 0 : i64, scratch_operands = 0 : i64, tpu.core_type = #tpu.core_type<tc>, window_params = [{transform_indices = @transform_0, window_bounds = array<i64: 8, 8>}, {pipeline_mode = #tpu.pipeline_mode<synchronous>, transform_indices = @transform_1, window_bounds = array<i64: 8, 128>}, {pipeline_mode = #tpu.pipeline_mode<synchronous>, transform_indices = @transform_2, window_bounds = array<i64: 1, 128>}, {pipeline_mode = #tpu.pipeline_mode<synchronous>, transform_indices = @transform_3, window_bounds = array<i64: 128, 128>}, {pipeline_mode = #tpu.pipeline_mode<synchronous>, transform_indices = @transform_4, window_bounds = array<i64: 1, 128>}, {transform_indices = @transform_5, window_bounds = array<i64: 8, 128>}]} {
    %c0 = arith.constant 0 : index
    %c0_0 = arith.constant 0 : index
    %0 = vector.load %arg1[%c0, %c0_0] : memref<8x8xf32, #tpu.memory_space<vmem>>, vector<8x8xf32>
    %c0_1 = arith.constant 0 : index
    %c0_2 = arith.constant 0 : index
    %1 = vector.load %arg2[%c0_1, %c0_2] : memref<8x128xf32, #tpu.memory_space<vmem>>, vector<8x128xf32>
    %cst = arith.constant dense<0.000000e+00> : vector<8x128xf32>
    %2 = tpu.matmul %0, %1, %cst {dimension_numbers = #tpu.dot_dimension_numbers<[1], [0], [0], [1], [0, 0, 1, 1], [], []>} : vector<8x8xf32>, vector<8x128xf32>, vector<8x128xf32> -> vector<8x128xf32>
    %c0_3 = arith.constant 0 : index
    %c0_4 = arith.constant 0 : index
    %3 = vector.load %arg3[%c0_3, %c0_4] : memref<1x128xf32, #tpu.memory_space<vmem>>, vector<1x128xf32>
    %4 = vector.broadcast %3 : vector<1x128xf32> to vector<8x128xf32>
    %5 = arith.addf %2, %4 : vector<8x128xf32>
    %cst_5 = arith.constant 0.00999999977 : f32
    %6 = vector.broadcast %cst_5 : f32 to vector<8x128xf32>
    %7 = arith.mulf %6, %5 : vector<8x128xf32>
    %8 = arith.maximumf %5, %7 : vector<8x128xf32>
    %9 = arith.truncf %8 : vector<8x128xf32> to vector<8x128xbf16>
    %c0_6 = arith.constant 0 : index
    %c0_7 = arith.constant 0 : index
    %10 = vector.load %arg4[%c0_6, %c0_7] : memref<128x128xbf16, #tpu.memory_space<vmem>>, vector<128x128xbf16>
    %cst_8 = arith.constant dense<0.000000e+00> : vector<8x128xf32>
    %11 = tpu.matmul %9, %10, %cst_8 {dimension_numbers = #tpu.dot_dimension_numbers<[1], [0], [0], [1], [0, 0, 1, 1], [], []>} : vector<8x128xbf16>, vector<128x128xbf16>, vector<8x128xf32> -> vector<8x128xf32>
    %c0_9 = arith.constant 0 : index
    %c0_10 = arith.constant 0 : index
    %12 = vector.load %arg5[%c0_9, %c0_10] : memref<1x128xf32, #tpu.memory_space<vmem>>, vector<1x128xf32>
    %13 = vector.broadcast %12 : vector<1x128xf32> to vector<8x128xf32>
    %14 = arith.addf %11, %13 : vector<8x128xf32>
    %15 = arith.truncf %14 : vector<8x128xf32> to vector<8x128xbf16>
    %c0_11 = arith.constant 0 : index
    %c0_12 = arith.constant 0 : index
    %16 = vector.load %arg6[%c0_11, %c0_12] : memref<8x128xbf16, #tpu.memory_space<vmem>>, vector<8x128xbf16>
    tpu.vector_store %arg6[%c0_11, %c0_12], %15 {strides = array<i32>} : memref<8x128xbf16, #tpu.memory_space<vmem>>, vector<8x128xbf16>,
    return
  }
  func.func @transform_0(%arg0: i32) -> (i32, i32) {
    %c0_i32 = arith.constant 0 : i32
    %c0_i32_0 = arith.constant 0 : i32
    return %arg0, %c0_i32 : i32, i32
  }
  func.func @transform_1(%arg0: i32) -> (i32, i32) {
    %c0_i32 = arith.constant 0 : i32
    %c0_i32_0 = arith.constant 0 : i32
    %c0_i32_1 = arith.constant 0 : i32
    return %c0_i32, %c0_i32_0 : i32, i32
  }
  func.func @transform_2(%arg0: i32) -> (i32, i32) {
    %c0_i32 = arith.constant 0 : i32
    %c0_i32_0 = arith.constant 0 : i32
    %c0_i32_1 = arith.constant 0 : i32
    return %c0_i32, %c0_i32_0 : i32, i32
  }
  func.func @transform_3(%arg0: i32) -> (i32, i32) {
    %c0_i32 = arith.constant 0 : i32
    %c0_i32_0 = arith.constant 0 : i32
    %c0_i32_1 = arith.constant 0 : i32
    return %c0_i32, %c0_i32_0 : i32, i32
  }
  func.func @transform_4(%arg0: i32) -> (i32, i32) {
    %c0_i32 = arith.constant 0 : i32
    %c0_i32_0 = arith.constant 0 : i32
    %c0_i32_1 = arith.constant 0 : i32
    return %c0_i32, %c0_i32_0 : i32, i32
  }
  func.func @transform_5(%arg0: i32) -> (i32, i32) {
    %c0_i32 = arith.constant 0 : i32
    %c0_i32_0 = arith.constant 0 : i32
    return %arg0, %c0_i32 : i32, i32
  }
}

</mosaic_0001>

<llo_original>
// kernel: net_state_encoder.1
$region0: #{net_state_encoder.1}
  #allocation0 [shape = 'u32[]', space=smem, size = 0x4, offset = 0x4, fixed_abs, tag = 'smem constant byte address 0x4 - core index']
  #allocation1 [shape = 'u32[144,128]{1,0:T(1,128)}', space=vmem, size = 0x12000, scoped, tag = 'internal scratch']
  %s0 = inlined_call_operand.vmem [shape: f32[16,8], index: 0, kind: input, shape index: {}]
  %s1 = inlined_call_operand.vmem [shape: f32[8,128], index: 1, kind: input, shape index: {}]
  %s2 = inlined_call_operand.vmem [shape: f32[1,128], index: 2, kind: input, shape index: {}]
  %s3 = inlined_call_operand.vmem [shape: bf16[128,128], index: 3, kind: input, shape index: {}]
  %s4 = inlined_call_operand.vmem [shape: f32[1,128], index: 4, kind: input, shape index: {}]
  %s5 = inlined_call_operand.hbm [shape: bf16[16,128], index: 5, kind: output, shape index: {}]
  %s6 = sld [smem:[#allocation0]]
  $region53: #{net_state_encoder.1} parent=0
    _
  %s8 = ssub.s32 1, %s6
  %s9 = scalar_select 0, %s8, %s6
  $region1: #{net_state_encoder.1} parent=0
    #allocation2 [shape = 'u8[4096]{0}', space=vmem, size = 0x1000, scoped, tag = 'output window, operand 0']
    #allocation3 [shape = 's32[2]{0}', space=sflag, size = 0x8, scoped, tag = 'scoped memory for net_state_encoder.1']
    %10 = vsyncpa [#allocation3], 0
    %s11 = scalar_lea.sflag [#allocation3], 1
    %12 = vsyncpa %s11, 0
    loop: start=0, step=1, limit=4
    $region2: #{net_state_encoder.1} parent=1 // loop_pre_header
      _
    $region3: #{net_state_encoder.1} parent=1 // loop_header
      %s14 = sphi 0, %s18
      %p15 = scmp.ge.s32.totalorder %s14, 4
      %s24 = sphi 0, %s26
      %s27 = sphi 0, %s24
      %s28 = sphi 0, %s27
      %s44 = sphi 0, %s28
      %s48 = sphi 0, %s48
      %s50 = sphi 0, %s48
      %s51 = sphi 0, %s50
      %s65 = sphi 0, %s51
      %s69 = sphi 0, %s69
      %s71 = sphi 0, %s69
      %s72 = sphi 0, %s71
      %s86 = sphi 0, %s72
      %s90 = sphi 0, %s90
      %s92 = sphi 0, %s90
      %s93 = sphi 0, %s92
      %s107 = sphi 0, %s93
      %s111 = sphi 0, %s111
      %s113 = sphi 0, %s111
      %s114 = sphi 0, %s113
      %s128 = sphi 0, %s114
      %s134 = sphi 0, %s136
      %s137 = sphi 0, %s134
      %s138 = sphi 0, %s137
      %s154 = sphi 0, %s138
    $region4: #{net_state_encoder.1} parent=1 // loop_header_branch
      %17 = sbr.rel (%p15) target = $region8
    $region5: #{net_state_encoder.1} parent=1 // loop_body
      %s19 = ssub.s32 %s14, 1
      %s20 = ssub.s32 %s14, 2
      %s21 = sadd.s32 %s14, 1
      %s22 = ssub.s32 %s14, %s21
      %p23 = scmp.eq.s32.totalorder %s22, 0
      %s25 = sadd.s32 %s24, 1
      %s26 = scalar_select %p23, %s24, %s25
      %p29 = pneg %p23
      %p30 = scmp.eq.s32.totalorder %s14, 1
      %p31 = por %p29, %p30
      %p32 = scmp.ne.s32.totalorder %s24, %s27
      %p33 = scmp.eq.s32.totalorder %s14, 0
      %p34 = por %p32, %p33
      %p35 = scmp.ne.s32.totalorder %s24, %s27
      %p36 = scmp.eq.s32.totalorder %s19, 1
      %p37 = por %p35, %p36
      %p38 = scmp.ne.s32.totalorder %s27, %s28
      %p39 = scmp.eq.s32.totalorder %s19, 0
      %p40 = por %p38, %p39
      %p41 = scmp.ne.s32.totalorder %s27, %s28
      %p42 = scmp.eq.s32.totalorder %s20, 1
      %p43 = por %p41, %p42
      %p45 = scmp.ne.s32.totalorder %s28, %s44
      %p46 = scmp.eq.s32.totalorder %s20, 0
      %p47 = por %p45, %p46
      %s49 = sadd.s32 %s48, 1
      %p52 = scmp.eq.s32.totalorder %s14, 1
      %p53 = scmp.ne.s32.totalorder %s48, %s50
      %p54 = scmp.eq.s32.totalorder %s14, 0
      %p55 = por %p53, %p54
      %p56 = scmp.ne.s32.totalorder %s48, %s50
      %p57 = scmp.eq.s32.totalorder %s19, 1
      %p58 = por %p56, %p57
      %p59 = scmp.ne.s32.totalorder %s50, %s51
      %p60 = scmp.eq.s32.totalorder %s19, 0
      %p61 = por %p59, %p60
      %p62 = scmp.ne.s32.totalorder %s50, %s51
      %p63 = scmp.eq.s32.totalorder %s20, 1
      %p64 = por %p62, %p63
      %p66 = scmp.ne.s32.totalorder %s51, %s65
      %p67 = scmp.eq.s32.totalorder %s20, 0
      %p68 = por %p66, %p67
      %s70 = sadd.s32 %s69, 1
      %p73 = scmp.eq.s32.totalorder %s14, 1
      %p74 = scmp.ne.s32.totalorder %s69, %s71
      %p75 = scmp.eq.s32.totalorder %s14, 0
      %p76 = por %p74, %p75
      %p77 = scmp.ne.s32.totalorder %s69, %s71
      %p78 = scmp.eq.s32.totalorder %s19, 1
      %p79 = por %p77, %p78
      %p80 = scmp.ne.s32.totalorder %s71, %s72
      %p81 = scmp.eq.s32.totalorder %s19, 0
      %p82 = por %p80, %p81
      %p83 = scmp.ne.s32.totalorder %s71, %s72
      %p84 = scmp.eq.s32.totalorder %s20, 1
      %p85 = por %p83, %p84
      %p87 = scmp.ne.s32.totalorder %s72, %s86
      %p88 = scmp.eq.s32.totalorder %s20, 0
      %p89 = por %p87, %p88
      %s91 = sadd.s32 %s90, 1
      %p94 = scmp.eq.s32.totalorder %s14, 1
      %p95 = scmp.ne.s32.totalorder %s90, %s92
      %p96 = scmp.eq.s32.totalorder %s14, 0
      %p97 = por %p95, %p96
      %p98 = scmp.ne.s32.totalorder %s90, %s92
      %p99 = scmp.eq.s32.totalorder %s19, 1
      %p100 = por %p98, %p99
      %p101 = scmp.ne.s32.totalorder %s92, %s93
      %p102 = scmp.eq.s32.totalorder %s19, 0
      %p103 = por %p101, %p102
      %p104 = scmp.ne.s32.totalorder %s92, %s93
      %p105 = scmp.eq.s32.totalorder %s20, 1
      %p106 = por %p104, %p105
      %p108 = scmp.ne.s32.totalorder %s93, %s107
      %p109 = scmp.eq.s32.totalorder %s20, 0
      %p110 = por %p108, %p109
      %s112 = sadd.s32 %s111, 1
      %p115 = scmp.eq.s32.totalorder %s14, 1
      %p116 = scmp.ne.s32.totalorder %s111, %s113
      %p117 = scmp.eq.s32.totalorder %s14, 0
      %p118 = por %p116, %p117
      %p119 = scmp.ne.s32.totalorder %s111, %s113
      %p120 = scmp.eq.s32.totalorder %s19, 1
      %p121 = por %p119, %p120
      %p122 = scmp.ne.s32.totalorder %s113, %s114
      %p123 = scmp.eq.s32.totalorder %s19, 0
      %p124 = por %p122, %p123
      %p125 = scmp.ne.s32.totalorder %s113, %s114
      %p126 = scmp.eq.s32.totalorder %s20, 1
      %p127 = por %p125, %p126
      %p129 = scmp.ne.s32.totalorder %s114, %s128
      %p130 = scmp.eq.s32.totalorder %s20, 0
      %p131 = por %p129, %p130
      %s132 = ssub.s32 %s14, %s21
      %p133 = scmp.eq.s32.totalorder %s132, 0
      %s135 = sadd.s32 %s134, 1
      %s136 = scalar_select %p133, %s134, %s135
      %p139 = pneg %p133
      %p140 = scmp.eq.s32.totalorder %s14, 1
      %p141 = por %p139, %p140
      %p142 = scmp.ne.s32.totalorder %s134, %s137
      %p143 = scmp.eq.s32.totalorder %s14, 0
      %p144 = por %p142, %p143
      %p145 = scmp.ne.s32.totalorder %s134, %s137
      %p146 = scmp.eq.s32.totalorder %s19, 1
      %p147 = por %p145, %p146
      %p148 = scmp.ne.s32.totalorder %s137, %s138
      %p149 = scmp.eq.s32.totalorder %s19, 0
      %p150 = por %p148, %p149
      %p151 = scmp.ne.s32.totalorder %s137, %s138
      %p152 = scmp.eq.s32.totalorder %s20, 1
      %p153 = por %p151, %p152
      %p155 = scmp.ne.s32.totalorder %s138, %s154
      %p156 = scmp.eq.s32.totalorder %s20, 0
      %p157 = por %p155, %p156
      %p158 = scmp.le.s32.totalorder 1, %s14
      %p159 = scmp.lt.s32.totalorder %s14, 3
      %p160 = pnand %p158, %p159
      %p161 = pneg %p160
      // Predicated region
      $region9: #{net_state_encoder.1} parent=5 // pred_check
        _
      $region10: #{net_state_encoder.1} parent=5 // pred_check_branch
        %163 = sbr.rel (%p160) target = $region12
      $region11: #{net_state_encoder.1} parent=5 // pred_region
        %s164 = ssub.s32 %s14, 1
        // Predicated region
        $region13: #{net_state_encoder.1} parent=11 // pred_check
          %p165 = pneg %p61
        $region14: #{net_state_encoder.1} parent=11 // pred_check_branch
          %167 = sbr.rel (%p165) target = $region16
        $region15: #{net_state_encoder.1} parent=11 // pred_region
          _
        $region16: #{net_state_encoder.1} parent=11 // pred_fallthru
          _
        // Predicated region
        $region17: #{net_state_encoder.1} parent=11 // pred_check
          %p168 = pneg %p82
        $region18: #{net_state_encoder.1} parent=11 // pred_check_branch
          %170 = sbr.rel (%p168) target = $region20
        $region19: #{net_state_encoder.1} parent=11 // pred_region
          _
        $region20: #{net_state_encoder.1} parent=11 // pred_fallthru
          _
        // Predicated region
        $region21: #{net_state_encoder.1} parent=11 // pred_check
          %p171 = pneg %p103
        $region22: #{net_state_encoder.1} parent=11 // pred_check_branch
          %173 = sbr.rel (%p171) target = $region24
        $region23: #{net_state_encoder.1} parent=11 // pred_region
          _
        $region24: #{net_state_encoder.1} parent=11 // pred_fallthru
          _
        // Predicated region
        $region25: #{net_state_encoder.1} parent=11 // pred_check
          %p174 = pneg %p124
        $region26: #{net_state_encoder.1} parent=11 // pred_check_branch
          %176 = sbr.rel (%p174) target = $region28
        $region27: #{net_state_encoder.1} parent=11 // pred_region
          _
        $region28: #{net_state_encoder.1} parent=11 // pred_fallthru
          _
      $region12: #{net_state_encoder.1} parent=5 // pred_fallthru
        _
      %p177 = scmp.lt.s32.totalorder %s14, 2
      // Predicated region
      $region29: #{net_state_encoder.1} parent=5 // pred_check
        %p178 = pneg %p177
      $region30: #{net_state_encoder.1} parent=5 // pred_check_branch
        %180 = sbr.rel (%p178) target = $region32
      $region31: #{net_state_encoder.1} parent=5 // pred_region
        // Predicated region
        $region33: #{net_state_encoder.1} parent=31 // pred_check
          %p181 = pneg %p34
        $region34: #{net_state_encoder.1} parent=31 // pred_check_branch
          %183 = sbr.rel (%p181) target = $region36
        $region35: #{net_state_encoder.1} parent=31 // pred_region
          %p184 = scmp.lt.s32.totalorder %s14, 1
          %s185 = scalar_select %p184, %s14, 1
          %s186 = smul.addr %s185, 8
          %s187 = scalar_lea.vmem %s0, %s186
        $region36: #{net_state_encoder.1} parent=31 // pred_fallthru
          _
      $region32: #{net_state_encoder.1} parent=5 // pred_fallthru
        _
      %p188 = scmp.le.s32.totalorder 1, %s14
      %p189 = scmp.lt.s32.totalorder %s14, 3
      %p190 = pnand %p188, %p189
      %p191 = pneg %p190
      // Predicated region
      $region37: #{net_state_encoder.1} parent=5 // pred_check
        _
      $region38: #{net_state_encoder.1} parent=5 // pred_check_branch
        %193 = sbr.rel (%p190) target = $region40
      $region39: #{net_state_encoder.1} parent=5 // pred_region
        %s194 = ssub.s32 %s14, 1
        %p195 = scmp.lt.s32.totalorder %s19, 1
        %s196 = scalar_select %p195, %s19, 1
        %s197 = smul.addr %s196, 8
        %s198 = scalar_lea.vmem %s0, %s197
        %p199 = pneg %p40
        %p200 = pneg %p37
        %p201 = pneg %p61
        %p202 = pneg %p58
        %p203 = pneg %p82
        %p204 = pneg %p79
        %p205 = pneg %p103
        %p206 = pneg %p100
        %p207 = pneg %p124
        %p208 = pneg %p121
        %p209 = pneg %p150
        %p210 = pneg %p147
        %s211 = sand.u32 %s137, 1
        %s212 = scalar_lea.sflag [#allocation3], %s211
        %s213 = sand.u32 %s137, 1
        %s214 = smul.addr %s213, 4
        %s215 = scalar_lea.vmem [#allocation2], %s214
        %p216 = scmp.lt.s32.totalorder %s19, 1
        %s217 = scalar_select %p216, %s19, 1
        %s218 = smul.addr %s217, 8
        %s219 = scalar_lea.vmem %s0, %s218
        %v221 = vld [vmem:[%s219] sm:$0xff]
        %v222 = vld [vmem:[%s1] sm:$0xff]
        %v223 = vld [vmem:[%s2] sm:$0x1]
        %v225 = vlaneseq
        %v226 = vshrl.u32 %v225, 7
        %v227 = vsub.s32 0, %v226
        %v228 = vrot.slane %v223, %v227
        %vm230 = vcmask 64512
        %v232 = vsel %vm230, %v221, 0
        %234 = vmatprep.subr.mxu0 0.0
        %235 = vmatpush1.msra.mxu0 %v222
        %236 = vmatprep.subr.mxu0 0.0
        %237 = vmatpush1.msra.mxu0 0.0
        %238 = vmatprep.subr.mxu0 0.0
        %239 = vmatpush1.msra.mxu0 0.0
        %240 = vmatprep.subr.mxu0 0.0
        %241 = vmatpush1.msra.mxu0 0.0
        %242 = vmatprep.subr.mxu0 0.0
        %243 = vmatpush1.msra.mxu0 0.0
        %244 = vmatprep.subr.mxu0 0.0
        %245 = vmatpush1.msra.mxu0 0.0
        %246 = vmatprep.subr.mxu0 0.0
        %247 = vmatpush1.msra.mxu0 0.0
        %248 = vmatprep.subr.mxu0 0.0
        %249 = vmatpush1.msra.mxu0 0.0
        %250 = vmatprep.subr.mxu0 0.0
        %251 = vmatpush1.msra.mxu0 0.0
        %252 = vmatprep.subr.mxu0 0.0
        %253 = vmatpush1.msra.mxu0 0.0
        %254 = vmatprep.subr.mxu0 0.0
        %255 = vmatpush1.msra.mxu0 0.0
        %256 = vmatprep.subr.mxu0 0.0
        %257 = vmatpush1.msra.mxu0 0.0
        %258 = vmatprep.subr.mxu0 0.0
        %259 = vmatpush1.msra.mxu0 0.0
        %260 = vmatprep.subr.mxu0 0.0
        %261 = vmatpush1.msra.mxu0 0.0
        %262 = vmatprep.subr.mxu0 0.0
        %263 = vmatpush1.msra.mxu0 0.0
        %264 = vmatprep.subr.mxu0 0.0
        %265 = vmatpush1.msra.mxu0 0.0
        %266 = vmatprep.subr.mxu0 0.0
        %267 = vmatpush1.msra.mxu0 0.0
        %268 = vmatprep.subr.mxu0 0.0
        %269 = vmatpush1.msra.mxu0 0.0
        %270 = vmatprep.subr.mxu0 0.0
        %271 = vmatpush1.msra.mxu0 0.0
        %272 = vmatprep.subr.mxu0 0.0
        %273 = vmatpush1.msra.mxu0 0.0
        %274 = vmatprep.subr.mxu0 0.0
        %275 = vmatpush1.msra.mxu0 0.0
        %276 = vmatprep.subr.mxu0 0.0
        %277 = vmatpush1.msra.mxu0 0.0
        %278 = vmatprep.subr.mxu0 0.0
        %279 = vmatpush1.msra.mxu0 0.0
        %280 = vmatprep.subr.mxu0 0.0
        %281 = vmatpush1.msra.mxu0 0.0
        %282 = vmatprep.subr.mxu0 0.0
        %283 = vmatpush1.msra.mxu0 0.0
        %284 = vmatprep.subr.mxu0 0.0
        %285 = vmatpush1.msra.mxu0 0.0
        %286 = vmatprep.subr.mxu0 0.0
        %287 = vmatpush1.msra.mxu0 0.0
        %288 = vmatprep.subr.mxu0 0.0
        %289 = vmatpush1.msra.mxu0 0.0
        %290 = vmatprep.subr.mxu0 0.0
        %291 = vmatpush1.msra.mxu0 0.0
        %292 = vmatprep.subr.mxu0 0.0
        %293 = vmatpush1.msra.mxu0 0.0
        %294 = vmatprep.subr.mxu0 0.0
        %295 = vmatpush1.msra.mxu0 0.0
        %296 = vmatprep.subr.mxu0 0.0
        %297 = vmatpush1.msra.mxu0 0.0
        %298 = vmatprep.mubr.f32.mxu0 0.0
        %299 = vmatmul.mubr.f32.gmra.mrb[0].mxu0 %v232
        %v300 = vpop.f32.mrb[0].mxu0
        %v301 = vadd.f32 %v228, %v300
        %v302 = vpop.f32.mrb[0].mxu0
        %303 = vdwg.mxu0
        %v304 = vmul.f32 %v301, 0.01
        %v305 = vmax.f32 %v301, %v304
        %v306 = vpack.c.bf16 %v305, %v305
        %v307 = vld [vmem:[%s3] sm:$0xf]
        %v308 = vld [vmem:[%s3 + $0x4] sm:$0xf]
        %v309 = vld [vmem:[%s3 + $0x8] sm:$0xf]
        %v310 = vld [vmem:[%s3 + $0xc] sm:$0xf]
        %v311 = vld [vmem:[%s3 + $0x10] sm:$0xf]
        %v312 = vld [vmem:[%s3 + $0x14] sm:$0xf]
        %v313 = vld [vmem:[%s3 + $0x18] sm:$0xf]
        %v314 = vld [vmem:[%s3 + $0x1c] sm:$0xf]
        %v315 = vld [vmem:[%s3 + $0x20] sm:$0xf]
        %v316 = vld [vmem:[%s3 + $0x24] sm:$0xf]
        %v317 = vld [vmem:[%s3 + $0x28] sm:$0xf]
        %v318 = vld [vmem:[%s3 + $0x2c] sm:$0xf]
        %v319 = vld [vmem:[%s3 + $0x30] sm:$0xf]
        %v320 = vld [vmem:[%s3 + $0x34] sm:$0xf]
        %v321 = vld [vmem:[%s3 + $0x38] sm:$0xf]
        %v322 = vld [vmem:[%s3 + $0x3c] sm:$0xf]
        %v323 = vld [vmem:[%s4] sm:$0x1]
        %v325 = vlaneseq
        %v326 = vshrl.u32 %v325, 7
        %v327 = vsub.s32 0, %v326
        %v328 = vrot.slane %v323, %v327
        %v346 = vunpack.c.l.b16 %v307
        %v347 = vunpack.c.l.b16 %v308
        %v348 = vunpack.c.l.b16 %v309
        %v349 = vunpack.c.l.b16 %v310
        %v350 = vunpack.c.l.b16 %v311
        %v351 = vunpack.c.l.b16 %v312
        %v352 = vunpack.c.l.b16 %v313
        %v353 = vunpack.c.l.b16 %v314
        %v354 = vunpack.c.l.b16 %v315
        %v355 = vunpack.c.l.b16 %v316
        %v356 = vunpack.c.l.b16 %v317
        %v357 = vunpack.c.l.b16 %v318
        %v358 = vunpack.c.l.b16 %v319
        %v359 = vunpack.c.l.b16 %v320
        %v360 = vunpack.c.l.b16 %v321
        %v361 = vunpack.c.l.b16 %v322
        %v362 = vpack.c.b16 %v347, %v346
        %v363 = vpack.c.b16 %v349, %v348
        %v364 = vpack.c.b16 %v351, %v350
        %v365 = vpack.c.b16 %v353, %v352
        %v366 = vpack.c.b16 %v355, %v354
        %v367 = vpack.c.b16 %v357, %v356
        %v368 = vpack.c.b16 %v359, %v358
        %v369 = vpack.c.b16 %v361, %v360
        %378 = vmatprep.subr.bf16.mxu0 0
        %379 = vmatpush1.bf16.msra.mxu0 %v362
        %380 = vmatprep.subr.bf16.mxu0 0
        %381 = vmatpush1.bf16.msra.mxu0 %v363
        %382 = vmatprep.subr.bf16.mxu0 0
        %383 = vmatpush1.bf16.msra.mxu0 %v364
        %384 = vmatprep.subr.bf16.mxu0 0
        %385 = vmatpush1.bf16.msra.mxu0 %v365
        %386 = vmatprep.subr.bf16.mxu0 0
        %387 = vmatpush1.bf16.msra.mxu0 %v366
        %388 = vmatprep.subr.bf16.mxu0 0
        %389 = vmatpush1.bf16.msra.mxu0 %v367
        %390 = vmatprep.subr.bf16.mxu0 0
        %391 = vmatpush1.bf16.msra.mxu0 %v368
        %392 = vmatprep.subr.bf16.mxu0 0
        %393 = vmatpush1.bf16.msra.mxu0 %v369
        %394 = vmatprep.subr.bf16.mxu0 0
        %395 = vmatpush1.bf16.msra.mxu0 0
        %396 = vmatprep.subr.bf16.mxu0 0
        %397 = vmatpush1.bf16.msra.mxu0 0
        %398 = vmatprep.subr.bf16.mxu0 0
        %399 = vmatpush1.bf16.msra.mxu0 0
        %400 = vmatprep.subr.bf16.mxu0 0
        %401 = vmatpush1.bf16.msra.mxu0 0
        %402 = vmatprep.subr.bf16.mxu0 0
        %403 = vmatpush1.bf16.msra.mxu0 0
        %404 = vmatprep.subr.bf16.mxu0 0
        %405 = vmatpush1.bf16.msra.mxu0 0
        %406 = vmatprep.subr.bf16.mxu0 0
        %407 = vmatpush1.bf16.msra.mxu0 0
        %408 = vmatprep.subr.bf16.mxu0 0
        %409 = vmatpush1.bf16.msra.mxu0 0
        %410 = vmatprep.mubr.bf16.mxu0 0
        %411 = vmatmul.mubr.bf16.gmra.mrb[0].mxu0 %v306
        %v412 = vpop.f32.mrb[0].mxu0
        %v413 = vadd.f32 %v328, %v412
        %v414 = vpop.f32.mrb[0].mxu0
        %v415 = vpop.f32.mrb[0].mxu0
        %v416 = vpop.f32.mrb[0].mxu0
        %417 = vdwg.mxu0
        %v418 = vpack.c.bf16 %v413, %v413
        %419 = vst [vmem:[%s215] sm:$0xf] %v418
        %s420 = sand.u32 %s137, 1
        %s421 = scalar_lea.sflag [#allocation3], %s420
        %s422 = sand.u32 %s137, 1
        %s423 = smul.addr %s422, 4
        %s424 = scalar_lea.vmem [#allocation2], %s423
        // Predicated region
        $region41: #{net_state_encoder.1} parent=39 // pred_check
          %p425 = pneg %p147
        $region42: #{net_state_encoder.1} parent=39 // pred_check_branch
          %427 = sbr.rel (%p425) target = $region44
        $region43: #{net_state_encoder.1} parent=39 // pred_region
          %s429 = ssub.s32 64, 64
          %430 = vsyncadd %s421, %s429
          %s431 = smul.addr %s19, 64
          %s432 = scalar_lea.hbm %s5, %s431
          %s434 = sshll.u32 %s424, 4
          %s435 = int_to_ptr.vmem [resolvable:$true] %s434
          %437 = dma.vmem_to_hbm [thread:$0]  %s435, 64, %s432, %s421
        $region44: #{net_state_encoder.1} parent=39 // pred_fallthru
          _
      $region40: #{net_state_encoder.1} parent=5 // pred_fallthru
        _
      %p438 = scmp.le.s32.totalorder 2, %s14
      // Predicated region
      $region45: #{net_state_encoder.1} parent=5 // pred_check
        %p439 = pneg %p438
      $region46: #{net_state_encoder.1} parent=5 // pred_check_branch
        %441 = sbr.rel (%p439) target = $region48
      $region47: #{net_state_encoder.1} parent=5 // pred_region
        %s442 = ssub.s32 %s14, 2
        // Predicated region
        $region49: #{net_state_encoder.1} parent=47 // pred_check
          %p443 = pneg %p153
        $region50: #{net_state_encoder.1} parent=47 // pred_check_branch
          %445 = sbr.rel (%p443) target = $region52
        $region51: #{net_state_encoder.1} parent=47 // pred_region
          %s446 = sand.u32 %s138, 1
          %s447 = scalar_lea.sflag [#allocation3], %s446
          %s448 = sand.u32 %s138, 1
          %s449 = smul.addr %s448, 4
          %s450 = scalar_lea.vmem [#allocation2], %s449
          %451 = dma.done %s447, 64
        $region52: #{net_state_encoder.1} parent=47 // pred_fallthru
          _
      $region48: #{net_state_encoder.1} parent=5 // pred_fallthru
        _
    $region6: #{net_state_encoder.1} parent=1 // loop_footer
      %s18 = sadd.s32 1, %s14
    $region7: #{net_state_encoder.1} parent=1 // loop_footer_branch
      %13 = sbr.rel target = $region3
    $region8: #{net_state_encoder.1} parent=1 // loop_exit
      _
    %452 = vsyncpa [#allocation3], 1
    %s453 = scalar_lea.sflag [#allocation3], 1
    %454 = vsyncpa %s453, 1

</llo_original>
